<compile_context>
chip_gen: v6e
topology: v6e:2x2x1
jax: 0.10.0
libtpu: 0.0.40
codegen_flags: <defaults>
</compile_context>

<pallas_src>
import functools

import jax
import jax.numpy as jnp
from jax.experimental import pallas as pl
from jax.experimental.pallas import tpu as pltpu

_EPS = 1e-6  # torch F.pairwise_distance default eps


def _contrastive_loss_kernel(margin_ref, o1_ref, o2_ref, lbl_ref, out_ref,
                             acc_ref, *, n_rows, tb):
    i = pl.program_id(0)

    @pl.when(i == 0)
    def _():
        acc_ref[0] = jnp.float32(0.0)

    # Load in native dtype, compute in f32.
    o1 = o1_ref[...].astype(jnp.float32)
    o2 = o2_ref[...].astype(jnp.float32)
    lbl = lbl_ref[...].astype(jnp.float32)                     # (TB, 1)

    diff = o1 - o2 + _EPS                                      # (TB, D)
    d2 = jnp.sum(diff * diff, axis=-1, keepdims=True)          # (TB, 1)
    d = jnp.sqrt(d2)

    margin = margin_ref[0, 0]
    pos = lbl * d2                                             # label * d^2
    neg = (1.0 - lbl) * jnp.square(jnp.maximum(margin - d, 0.0))
    per_row = pos + neg                                        # (TB, 1)

    # Mask rows past B (only matters when B % TB != 0 in the last block).
    row = i * tb + jax.lax.broadcasted_iota(jnp.int32, per_row.shape, 0)
    per_row = jnp.where(row < n_rows, per_row, 0.0)

    acc_ref[0] += jnp.sum(per_row)

    @pl.when(i == pl.num_programs(0) - 1)
    def _():
        out_ref[0, 0] = acc_ref[0] / jnp.float32(n_rows)


def contrastive_loss(output1, output2, label, margin=1.0):
    B, D = output1.shape
    assert label.shape == (B, 1)

    # Row-tile choice: whole array if small; otherwise a block sized so
    # 2 inputs x 2 double-buffers x TB x D x 4B stays a few MiB (safe on
    # v5e default scoped VMEM and v7x's 64 MiB physical VMEM).
    if B <= 1024:
        tb = B
    else:
        tb = max(8, min(1024, ((4 << 20) // (D * 4)) // 8 * 8))
    grid = (pl.cdiv(B, tb),)

    margin_arr = jnp.full((1, 1), margin, dtype=jnp.float32)
    kernel = functools.partial(_contrastive_loss_kernel, n_rows=B, tb=tb)

    out = pl.pallas_call(
        kernel,
        out_shape=jax.ShapeDtypeStruct((1, 1), jnp.float32),
        grid=grid,
        in_specs=[
            pl.BlockSpec(memory_space=pltpu.SMEM),          # margin scalar
            pl.BlockSpec((tb, D), lambda i: (i, 0)),        # output1 tile
            pl.BlockSpec((tb, D), lambda i: (i, 0)),        # output2 tile
            pl.BlockSpec((tb, 1), lambda i: (i, 0)),        # label tile
        ],
        out_specs=pl.BlockSpec(memory_space=pltpu.SMEM),    # scalar loss in SMEM
        scratch_shapes=[pltpu.SMEM((1,), jnp.float32)],     # running sum
        compiler_params=pltpu.CompilerParams(
            dimension_semantics=("arbitrary",)),
    )(margin_arr, output1, output2, label)
    return out[0, 0]


def _reference(output1, output2, label, margin=1.0):
    diff = output1.astype(jnp.float32) - output2.astype(jnp.float32) + _EPS
    d = jnp.sqrt(jnp.sum(diff * diff, axis=-1, keepdims=True))
    loss = jnp.mean(label * d ** 2
                    + (1.0 - label) * jnp.maximum(margin - d, 0.0) ** 2)
    return loss


if __name__ == "__main__":
    key = jax.random.PRNGKey(0)
    k1, k2, k3 = jax.random.split(key, 3)
    B, D = 8, 32
    output1 = jax.random.normal(k1, (B, D), dtype=jnp.float32)
    output2 = jax.random.normal(k2, (B, D), dtype=jnp.float32)
    label = jax.random.bernoulli(k3, 0.5, (B, 1)).astype(jnp.float32)

    loss = contrastive_loss(output1, output2, label, margin=1.0)
    loss = jax.block_until_ready(loss)

    ref = _reference(output1, output2, label, margin=1.0)
    assert jnp.allclose(loss, ref, rtol=1e-5, atol=1e-5), (loss, ref)
    print("KERNEL_OK")
</pallas_src>

<mosaic_0001>
module attributes {stable_mosaic.version = 11 : i64} {
  func.func @_contrastive_loss_kernel(%arg0: i32, %arg1: memref<1x1xf32, #tpu.memory_space<smem>>, %arg2: memref<8x32xf32, #tpu.memory_space<vmem>>, %arg3: memref<8x32xf32, #tpu.memory_space<vmem>>, %arg4: memref<8x1xf32, #tpu.memory_space<vmem>>, %arg5: memref<1x1xf32, #tpu.memory_space<smem>>, %arg6: memref<1xf32, #tpu.memory_space<smem>>) attributes {dimension_semantics = [#tpu.dimension_semantics<arbitrary>], iteration_bounds = array<i64: 1>, scalar_prefetch = 0 : i64, scratch_operands = 1 : i64, tpu.core_type = #tpu.core_type<tc>, window_params = [{transform_indices = @transform_0, window_bounds = array<i64: 1, 1>}, {transform_indices = @transform_1, window_bounds = array<i64: 8, 32>}, {transform_indices = @transform_2, window_bounds = array<i64: 8, 32>}, {transform_indices = @transform_3, window_bounds = array<i64: 8, 1>}, {transform_indices = @transform_4, window_bounds = array<i64: 1, 1>}]} {
    %c0_i32 = arith.constant 0 : i32
    %0 = arith.cmpi eq, %arg0, %c0_i32 : i32
    %1 = arith.extui %0 : i1 to i32
    %c0_i32_0 = arith.constant 0 : i32
    %2 = arith.cmpi ne, %1, %c0_i32_0 : i32
    scf.if %2 {
      %cst_18 = arith.constant 0.000000e+00 : f32
      %c0_19 = arith.constant 0 : index
      %42 = memref.load %arg6[%c0_19] : memref<1xf32, #tpu.memory_space<smem>>
      memref.store %cst_18, %arg6[%c0_19] : memref<1xf32, #tpu.memory_space<smem>>
    } else {
    }
    %c0 = arith.constant 0 : index
    %c0_1 = arith.constant 0 : index
    %3 = vector.load %arg2[%c0, %c0_1] : memref<8x32xf32, #tpu.memory_space<vmem>>, vector<8x32xf32>
    %c0_2 = arith.constant 0 : index
    %c0_3 = arith.constant 0 : index
    %4 = vector.load %arg3[%c0_2, %c0_3] : memref<8x32xf32, #tpu.memory_space<vmem>>, vector<8x32xf32>
    %c0_4 = arith.constant 0 : index
    %c0_5 = arith.constant 0 : index
    %5 = vector.load %arg4[%c0_4, %c0_5] : memref<8x1xf32, #tpu.memory_space<vmem>>, vector<8x1xf32>
    %6 = arith.subf %3, %4 : vector<8x32xf32>
    %cst = arith.constant 9.99999997E-7 : f32
    %7 = vector.broadcast %cst : f32 to vector<8x32xf32>
    %8 = arith.addf %6, %7 : vector<8x32xf32>
    %9 = arith.mulf %8, %8 : vector<8x32xf32>
    %cst_6 = arith.constant dense<0.000000e+00> : vector<8xf32>
    %10 = vector.multi_reduction <add>, %9, %cst_6 [1] : vector<8x32xf32> to vector<8xf32>
    %11 = vector.shape_cast %10 : vector<8xf32> to vector<8x1xf32>
    %12 = math.sqrt %11 : vector<8x1xf32>
    %c0_7 = arith.constant 0 : index
    %c0_8 = arith.constant 0 : index
    %13 = memref.load %arg1[%c0_7, %c0_8] : memref<1x1xf32, #tpu.memory_space<smem>>
    %14 = arith.mulf %5, %11 : vector<8x1xf32>
    %cst_9 = arith.constant 1.000000e+00 : f32
    %15 = vector.broadcast %cst_9 : f32 to vector<8x1xf32>
    %16 = arith.subf %15, %5 : vector<8x1xf32>
    %17 = vector.broadcast %13 : f32 to vector<8x1xf32>
    %18 = arith.subf %17, %12 : vector<8x1xf32>
    %cst_10 = arith.constant 0.000000e+00 : f32
    %19 = vector.broadcast %cst_10 : f32 to vector<8x1xf32>
    %20 = arith.maximumf %18, %19 : vector<8x1xf32>
    %21 = arith.mulf %20, %20 : vector<8x1xf32>
    %22 = arith.mulf %16, %21 : vector<8x1xf32>
    %23 = arith.addf %14, %22 : vector<8x1xf32>
    %c8_i32 = arith.constant 8 : i32
    %24 = arith.muli %arg0, %c8_i32 : i32
    %25 = tpu.iota {dimensions = array<i32: 0>} : vector<8x1xi32>
    %26 = vector.broadcast %24 : i32 to vector<8x1xi32>
    %27 = arith.addi %26, %25 : vector<8x1xi32>
    %c8_i32_11 = arith.constant 8 : i32
    %28 = vector.broadcast %c8_i32_11 : i32 to vector<8x1xi32>
    %29 = arith.cmpi slt, %27, %28 : vector<8x1xi32>
    %cst_12 = arith.constant 0.000000e+00 : f32
    %30 = vector.broadcast %cst_12 : f32 to vector<8x1xf32>
    %31 = arith.select %29, %23, %30 : vector<8x1xi1>, vector<8x1xf32>
    %c0_13 = arith.constant 0 : index
    %32 = memref.load %arg6[%c0_13] : memref<1xf32, #tpu.memory_space<smem>>
    %33 = vector.shape_cast %31 : vector<8x1xf32> to vector<1x8x1xf32>
    %cst_14 = arith.constant dense<0.000000e+00> : vector<1xf32>
    %34 = vector.multi_reduction <add>, %33, %cst_14 [1, 2] : vector<1x8x1xf32> to vector<1xf32>
    %35 = vector.shape_cast %34 : vector<1xf32> to vector<1x1x1xf32>
    %36 = vector.extract %35[0, 0, 0] : f32 from vector<1x1x1xf32>
    %37 = arith.addf %32, %36 : f32
    %c0_15 = arith.constant 0 : index
    %38 = memref.load %arg6[%c0_15] : memref<1xf32, #tpu.memory_space<smem>>
    memref.store %37, %arg6[%c0_15] : memref<1xf32, #tpu.memory_space<smem>>
    %c0_i32_16 = arith.constant 0 : i32
    %39 = arith.cmpi eq, %arg0, %c0_i32_16 : i32
    %40 = arith.extui %39 : i1 to i32
    %c0_i32_17 = arith.constant 0 : i32
    %41 = arith.cmpi ne, %40, %c0_i32_17 : i32
    scf.if %41 {
      %c0_18 = arith.constant 0 : index
      %42 = memref.load %arg6[%c0_18] : memref<1xf32, #tpu.memory_space<smem>>
      %cst_19 = arith.constant 8.000000e+00 : f32
      %43 = arith.divf %42, %cst_19 : f32
      %c0_20 = arith.constant 0 : index
      %c0_21 = arith.constant 0 : index
      %44 = memref.load %arg5[%c0_20, %c0_21] : memref<1x1xf32, #tpu.memory_space<smem>>
      memref.store %43, %arg5[%c0_20, %c0_21] : memref<1x1xf32, #tpu.memory_space<smem>>
    } else {
    }
    return
  }
  func.func @transform_0(%arg0: i32) -> (i32, i32) {
    %c0_i32 = arith.constant 0 : i32
    %c0_i32_0 = arith.constant 0 : i32
    %c0_i32_1 = arith.constant 0 : i32
    return %c0_i32, %c0_i32_0 : i32, i32
  }
  func.func @transform_1(%arg0: i32) -> (i32, i32) {
    %c0_i32 = arith.constant 0 : i32
    %c0_i32_0 = arith.constant 0 : i32
    return %arg0, %c0_i32 : i32, i32
  }
  func.func @transform_2(%arg0: i32) -> (i32, i32) {
    %c0_i32 = arith.constant 0 : i32
    %c0_i32_0 = arith.constant 0 : i32
    return %arg0, %c0_i32 : i32, i32
  }
  func.func @transform_3(%arg0: i32) -> (i32, i32) {
    %c0_i32 = arith.constant 0 : i32
    %c0_i32_0 = arith.constant 0 : i32
    return %arg0, %c0_i32 : i32, i32
  }
  func.func @transform_4(%arg0: i32) -> (i32, i32) {
    %c0_i32 = arith.constant 0 : i32
    %c0_i32_0 = arith.constant 0 : i32
    %c0_i32_1 = arith.constant 0 : i32
    return %c0_i32, %c0_i32_0 : i32, i32
  }
}

</mosaic_0001>

<llo_original>
// kernel: tpu_custom_call.1
$region0: #{tpu_custom_call.1}
  #allocation0 [shape = 'u32[]', space=smem, size = 0x4, offset = 0x4, fixed_abs, tag = 'smem constant byte address 0x4 - core index']
  #allocation1 [shape = 'u32[144,128]{1,0:T(1,128)}', space=vmem, size = 0x12000, scoped, tag = 'internal scratch']
  #allocation2 [shape = 'f32[1]{0:T(128)}', space=smem, size = 0x200, scoped, tag = 'scratch operand']
  #allocation3 [shape = 'f32[1,1]{1,0:T(1,128)S(6)}', space=smem, size = 0x200, scoped, tag = 'scoped memory for tpu_custom_call.1']
  %s0 = inlined_call_operand.<no memory space> [shape: f32[1,1], index: 0, kind: input, shape index: {}]
  %s1 = inlined_call_operand.vmem [shape: f32[8,32], index: 1, kind: input, shape index: {}]
  %s2 = inlined_call_operand.hbm [shape: f32[8,32], index: 2, kind: input, shape index: {}]
  %s3 = inlined_call_operand.vmem [shape: f32[8,1], index: 3, kind: input, shape index: {}]
  %s4 = inlined_call_operand.hbm [shape: f32[1,1], index: 4, kind: output, shape index: {}]
  %s5 = sld [smem:[#allocation0]]
  $region38: #{tpu_custom_call.1} parent=0
    _
  %s7 = ssub.s32 1, %s5
  %s8 = scalar_select 0, %s7, %s5
  %9 = sst [smem:[#allocation3]] %s0
  $region1: #{tpu_custom_call.1} parent=0
    #allocation4 [shape = 'u8[4096]{0}', space=vmem, size = 0x1000, scoped, tag = 'input window, operand 2, single buffered']
    #allocation5 [shape = 's32[1]{0}', space=sflag, size = 0x4, scoped, tag = 'scoped memory for tpu_custom_call.1']
    #allocation6 [shape = 's32[1]{0}', space=sflag, size = 0x4, scoped, tag = 'scoped memory for tpu_custom_call.1']
    #allocation7 [shape = 'u8[512]{0}', space=smem, size = 0x200, scoped, tag = 'output window, operand 0, single buffered']
    %10 = vsyncpa [#allocation5], 0
    %11 = vsyncpa [#allocation6], 0
    // Predicated region
    $region2: #{tpu_custom_call.1} parent=1 // pred_check
      _
    $region3: #{tpu_custom_call.1} parent=1 // pred_check_branch
      %13 = sbr.rel (0) target = $region5
    $region4: #{tpu_custom_call.1} parent=1 // pred_region
      _
    $region5: #{tpu_custom_call.1} parent=1 // pred_fallthru
      _
    // Predicated region
    $region6: #{tpu_custom_call.1} parent=1 // pred_check
      _
    $region7: #{tpu_custom_call.1} parent=1 // pred_check_branch
      %15 = sbr.rel (0) target = $region9
    $region8: #{tpu_custom_call.1} parent=1 // pred_region
      _
    $region9: #{tpu_custom_call.1} parent=1 // pred_fallthru
      _
    // Predicated region
    $region10: #{tpu_custom_call.1} parent=1 // pred_check
      _
    $region11: #{tpu_custom_call.1} parent=1 // pred_check_branch
      %17 = sbr.rel (0) target = $region13
    $region12: #{tpu_custom_call.1} parent=1 // pred_region
      %s19 = ssub.s32 128, 128
      %20 = vsyncadd [#allocation5], %s19
      %s22 = sshll.u32 [#allocation4], 4
      %s23 = int_to_ptr.vmem [resolvable:$true] %s22
      %25 = dma.hbm_to_vmem [thread:$0]  %s2, 128, %s23, [#allocation5]
    $region13: #{tpu_custom_call.1} parent=1 // pred_fallthru
      _
    // Predicated region
    $region14: #{tpu_custom_call.1} parent=1 // pred_check
      _
    $region15: #{tpu_custom_call.1} parent=1 // pred_check_branch
      %27 = sbr.rel (0) target = $region17
    $region16: #{tpu_custom_call.1} parent=1 // pred_region
      _
    $region17: #{tpu_custom_call.1} parent=1 // pred_fallthru
      _
    // Predicated region
    $region18: #{tpu_custom_call.1} parent=1 // pred_check
      _
    $region19: #{tpu_custom_call.1} parent=1 // pred_check_branch
      %29 = sbr.rel (0) target = $region21
    $region20: #{tpu_custom_call.1} parent=1 // pred_region
      %30 = dma.done [#allocation5], 128
    $region21: #{tpu_custom_call.1} parent=1 // pred_fallthru
      _
    %p31 = scmp.eq.s32.totalorder 0, 0
    // Predicated region
    $region22: #{tpu_custom_call.1} parent=1 // pred_check
      %p32 = pneg %p31
    $region23: #{tpu_custom_call.1} parent=1 // pred_check_branch
      %34 = sbr.rel (%p32) target = $region25
    $region24: #{tpu_custom_call.1} parent=1 // pred_region
      %s35 = scalar_lea.smem [#allocation2], 0
      %36 = sst [smem:[%s35]] 0.0
    $region25: #{tpu_custom_call.1} parent=1 // pred_fallthru
      _
    %v37 = vld [vmem:[%s1] sm:$0xff]
    %v38 = vld [vmem:[#allocation4] sm:$0xff]
    %v39 = vld [vmem:[%s3] sm:$0xff]
    %v40 = vsub.f32 %v37, %v38
    %v41 = vadd.f32 %v40, 1e-06
    %v42 = vmul.f32 %v41, %v41
    %vm43 = vcmask 261120
    %v44 = vsel %vm43, %v42, 0.0
    %45 = vadd.xlane.f32.xlu0 %v44
    %v46 = vpop.xlane.xlu0 %45
    %v47 = vrsqrt.pop %v46
    %v48 = vmul.f32 %v46, %v47
    %vm49 = vcmp.eq.f32.partialorder %v46, inf
    %v50 = vsel %vm49, %v46, %v48
    %vm51 = vcmp.eq.f32.partialorder %v46, 0.0
    %v52 = vand.u32 %v46, 2147483648
    %v53 = vsel %vm51, %v52, %v50
    %s54 = sld [smem:[#allocation3]]
    %v55 = vmul.f32 %v39, %v46
    %v56 = vsub.f32 1.0, %v39
    %v57 = vstv %s54
    %v58 = vsub.f32 %v57, %v53
    %v59 = vmax.f32 %v58, 0.0
    %v60 = vmul.f32 %v59, %v59
    %v61 = vmul.f32 %v56, %v60
    %v62 = vadd.f32 %v55, %v61
    %s63 = smul.u32 0, 8
    %v64 = vlaneseq
    %v65 = vshrl.u32 %v64, 7
    %v66 = vstv %s63
    %v67 = vadd.s32 %v66, %v65
    %vm68 = vcmp.lt.s32.totalorder %v67, 8
    %v69 = vsel %vm68, %v62, 0.0
    %s70 = sld [smem:[#allocation2]]
    %vm71 = vcmask 7168
    %v72 = vsel %vm71, %v69, 0.0
    %73 = vadd.xlane.f32.xlu0 %v72
    %v74 = vpop.xlane.xlu0 %73
    %v75 = vrot.slane %v74, 4
    %v76 = vadd.f32 %v74, %v75
    %v77 = vrot.slane %v76, 2
    %v78 = vadd.f32 %v76, %v77
    %v79 = vrot.slane %v78, 1
    %v80 = vadd.f32 %v78, %v79
    %s81 = vtos %v80
    %s82 = sadd.f32 %s70, %s81
    %s83 = scalar_lea.smem [#allocation2], 0
    %84 = sst [smem:[%s83]] %s82
    // Predicated region
    $region26: #{tpu_custom_call.1} parent=1 // pred_check
      %p85 = pneg %p31
    $region27: #{tpu_custom_call.1} parent=1 // pred_check_branch
      %87 = sbr.rel (%p85) target = $region29
    $region28: #{tpu_custom_call.1} parent=1 // pred_region
      %s88 = sld [smem:[#allocation2]]
      %v89 = vrcp.pop 8.0
      %s90 = vtos %v89
      %s91 = smul.f32 %s88, %s90
      %s92 = scalar_lea.smem [#allocation7], 0
      %93 = sst [smem:[%s92]] %s91
    $region29: #{tpu_custom_call.1} parent=1 // pred_fallthru
      _
    // Predicated region
    $region30: #{tpu_custom_call.1} parent=1 // pred_check
      _
    $region31: #{tpu_custom_call.1} parent=1 // pred_check_branch
      %95 = sbr.rel (0) target = $region33
    $region32: #{tpu_custom_call.1} parent=1 // pred_region
      %s97 = ssub.s32 16, 16
      %98 = vsyncadd [#allocation6], %s97
      %101 = dma.smem_to_hbm [#allocation7], 16, %s4, [#allocation6]
    $region33: #{tpu_custom_call.1} parent=1 // pred_fallthru
      _
    // Predicated region
    $region34: #{tpu_custom_call.1} parent=1 // pred_check
      _
    $region35: #{tpu_custom_call.1} parent=1 // pred_check_branch
      %103 = sbr.rel (0) target = $region37
    $region36: #{tpu_custom_call.1} parent=1 // pred_region
      %104 = dma.done [#allocation6], 16
    $region37: #{tpu_custom_call.1} parent=1 // pred_fallthru
      _
    %105 = sfence
    %106 = vsyncpa [#allocation5], 1
    %107 = vsyncpa [#allocation6], 1

</llo_original>
